<compile_context>
chip_gen: v5e
topology: v5e:2x2
jax: 0.10.0
libtpu: 0.0.40
codegen_flags: <defaults>
</compile_context>

<pallas_src>
import functools

import jax
import jax.numpy as jnp
from jax import lax
from jax.experimental import pallas as pl
from jax.experimental.pallas import tpu as pltpu

EPS = 1e-6          # torch.nn.PairwiseDistance default eps (added to the difference)
NEG_BIG = -1e30     # beta padding value: exp(NEG_BIG - dist) underflows to exactly 0.0
VMEM_LIMIT = 48 * 1024 * 1024   # safe on v5e/v6e (128 MiB) and v7x (64 MiB)


def _round_up(x, m):
    return ((x + m - 1) // m) * m


def _split_even(n_aligned, align, cap, want_multi):
    """Pick (tile, padded_extent): tile <= cap, multiple of `align`, padding < 1 tile.
    If `want_multi`, keep >= 2 tiles when possible so the 'parallel' grid axis can be
    sharded across the two TensorCores on v7x."""
    n_tiles = max(1, -(-n_aligned // cap))
    if want_multi and n_tiles == 1 and n_aligned >= 2 * align:
        n_tiles = 2
    tile = _round_up(-(-n_aligned // n_tiles), align)
    return tile, tile * max(1, -(-n_aligned // tile))


# ---------------------------------------------------------------------------
# Kernel 1: link term   sum_e (beta_pair_e - ||x_e - y_e + eps||_2)
# Lane-dense layout: edges on the 128-lane axis, D on the sublane axis.
# ---------------------------------------------------------------------------
def _link_kernel(bsum_ref, x_ref, y_ref, out_ref, *, te, n_edges):
    # bsum_ref: (1, TE)   beta_p_star[e0] + beta_p[e1]
    # x_ref   : (D, TE)   p[e0]^T
    # y_ref   : (D, TE)   p_star[e1]^T
    # out_ref : (1, 128)  per-tile partial sum (scalar in lane 0, zeros elsewhere)
    j = pl.program_id(0)
    diff = x_ref[...] - y_ref[...] + EPS                              # (D, TE)
    dist = jnp.sqrt(jnp.sum(diff * diff, axis=0, keepdims=True))      # (1, TE)
    contrib = bsum_ref[...] - dist                                    # (1, TE)
    lane = lax.broadcasted_iota(jnp.int32, (1, 128), 1)

    @pl.when((j + 1) * te <= n_edges)          # tile has no padded edges: no mask
    def _full():
        s = jnp.sum(contrib, keepdims=True)                           # (1, 1)
        out_ref[...] = jnp.where(lane == 0, s, 0.0)

    @pl.when((j + 1) * te > n_edges)           # tile contains padded edges
    def _masked():
        col = j * te + lax.broadcasted_iota(jnp.int32, (1, te), 1)
        s = jnp.sum(jnp.where(col < n_edges, contrib, 0.0), keepdims=True)
        out_ref[...] = jnp.where(lane == 0, s, 0.0)


def link_log_intensity_sum(beta_pair, x, y):
    E, D = x.shape
    # >= ~2 MB of input per grid step (vs ~36 KB before); padding waste < 1 tile.
    TE, E_pad = _split_even(_round_up(E, 128), 128, 32768, want_multi=True)
    n_tiles = E_pad // TE

    # TODO(synk): bf16 inputs (upcast in-kernel) would ~halve HBM bytes on v5e/v6e,
    # but may not hold the 1e-4 tolerance; keep f32.
    xT = jnp.pad(x.T.astype(jnp.float32), ((0, 0), (0, E_pad - E)))
    yT = jnp.pad(y.T.astype(jnp.float32), ((0, 0), (0, E_pad - E)))
    bs = jnp.pad(beta_pair.astype(jnp.float32)[None, :], ((0, 0), (0, E_pad - E)))

    out = pl.pallas_call(
        functools.partial(_link_kernel, te=TE, n_edges=E),
        out_shape=jax.ShapeDtypeStruct((1, n_tiles * 128), jnp.float32),
        grid=(n_tiles,),
        in_specs=[
            pl.BlockSpec((1, TE), lambda j: (0, j)),
            pl.BlockSpec((D, TE), lambda j: (0, j)),
            pl.BlockSpec((D, TE), lambda j: (0, j)),
        ],
        out_specs=pl.BlockSpec((1, 128), lambda j: (0, j)),
        compiler_params=pltpu.CompilerParams(
            dimension_semantics=("parallel",),
            vmem_limit_bytes=VMEM_LIMIT),
    )(bs, xT, yT)
    return jnp.sum(out)


# ---------------------------------------------------------------------------
# Kernel 2: non-link term  sum over strict upper triangle (col > row) of
#           exp(beta_s[row] + beta_q[col] - ||P_star[row] - P[col]||_2)
# Grid: (Ns tiles [parallel], Np tiles [arbitrary / reduction, accumulated in out]).
# Squared distances come straight out of one augmented MXU dot.
# ---------------------------------------------------------------------------
def _nonlink_kernel(beta_s_ref, beta_q_ref, ps_ref, pqt_ref, out_ref, *, ts, tq):
    # beta_s_ref: (TS, 1)    beta_q_ref: (1, TQ)
    # ps_ref    : (TS, K)    [p_star, ||p_star||^2, 1]
    # pqt_ref   : (K, TQ)    [-2*p^T ; 1 ; ||p||^2]
    # out_ref   : (1, TQ)    per-Ns-tile running column sums (accumulated over j)
    i = pl.program_id(0)
    j = pl.program_id(1)

    @pl.when(j == 0)
    def _init():
        out_ref[...] = jnp.zeros_like(out_ref)

    # Strict upper triangle: tile contributes iff its max column index (j+1)*tq-1
    # exceeds its min row index i*ts; otherwise skip the dot/exp entirely.
    @pl.when((j + 1) * tq - 1 > i * ts)
    def _compute():
        sqd = jnp.dot(ps_ref[...], pqt_ref[...],
                      preferred_element_type=jnp.float32)              # (TS, TQ)
        dist = jnp.sqrt(jnp.maximum(sqd, 0.0))                         # cdist, p=2
        mat = jnp.exp(beta_s_ref[...] + beta_q_ref[...] - dist)        # (TS, TQ)

        interior = j * tq >= (i + 1) * ts      # every col index > every row index

        @pl.when(interior)                     # fully above the diagonal: no mask
        def _no_mask():
            out_ref[...] += jnp.sum(mat, axis=0, keepdims=True)

        @pl.when(jnp.logical_not(interior))    # straddles the diagonal: mask
        def _diag():
            rows = i * ts + lax.broadcasted_iota(jnp.int32, (ts, 1), 0)
            cols = j * tq + lax.broadcasted_iota(jnp.int32, (1, tq), 1)
            out_ref[...] += jnp.sum(jnp.where(cols > rows, mat, 0.0),
                                    axis=0, keepdims=True)


def nonlink_intensity_sum(beta_s, beta_q, p_star_sel, p_sel):
    Ns, D = p_star_sel.shape
    Np = p_sel.shape[0]
    K = D + 2

    TS, Ns_pad = _split_even(_round_up(Ns, 8), 8, 512, want_multi=True)
    TQ, Np_pad = _split_even(_round_up(Np, 128), 128, 1024, want_multi=False)
    n_i = Ns_pad // TS
    n_j = Np_pad // TQ

    ps = p_star_sel.astype(jnp.float32)
    pq = p_sel.astype(jnp.float32)
    sq_s = jnp.sum(ps * ps, axis=-1, keepdims=True)                 # (Ns, 1)
    sq_q = jnp.sum(pq * pq, axis=-1, keepdims=True)                 # (Np, 1)

    # Augment so  A @ B = ||ps||^2 + ||pq||^2 - 2*ps.pq  (the squared distance).
    ps_aug = jnp.concatenate(
        [ps, sq_s, jnp.ones((Ns, 1), jnp.float32)], axis=1)         # (Ns, K)
    pq_aug = jnp.concatenate(
        [-2.0 * pq, jnp.ones((Np, 1), jnp.float32), sq_q], axis=1)  # (Np, K)
    ps_aug = jnp.pad(ps_aug, ((0, Ns_pad - Ns), (0, 0)))
    pq_augT = jnp.pad(pq_aug.T, ((0, 0), (0, Np_pad - Np)))         # (K, Np_pad)

    # Padded rows/cols get beta = NEG_BIG so exp() is exactly 0 for them.
    beta_s_pad = jnp.pad(beta_s.astype(jnp.float32)[:, None],
                         ((0, Ns_pad - Ns), (0, 0)), constant_values=NEG_BIG)
    beta_q_pad = jnp.pad(beta_q.astype(jnp.float32)[None, :],
                         ((0, 0), (0, Np_pad - Np)), constant_values=NEG_BIG)

    out = pl.pallas_call(
        functools.partial(_nonlink_kernel, ts=TS, tq=TQ),
        out_shape=jax.ShapeDtypeStruct((1, n_i * TQ), jnp.float32),
        grid=(n_i, n_j),
        in_specs=[
            pl.BlockSpec((TS, 1), lambda i, j: (i, 0)),    # beta_s
            pl.BlockSpec((1, TQ), lambda i, j: (0, j)),    # beta_q
            pl.BlockSpec((TS, K), lambda i, j: (i, 0)),    # augmented p_star
            pl.BlockSpec((K, TQ), lambda i, j: (0, j)),    # augmented p^T
        ],
        out_specs=pl.BlockSpec((1, TQ), lambda i, j: (0, i)),   # resident over j
        compiler_params=pltpu.CompilerParams(
            dimension_semantics=("parallel", "arbitrary"),
            vmem_limit_bytes=VMEM_LIMIT),
    )(beta_s_pad, beta_q_pad, ps_aug, pq_augT)
    return jnp.sum(out)


# ---------------------------------------------------------------------------
# LDM.forward equivalent
# ---------------------------------------------------------------------------
def ldm_forward(params, edges, nodes_p_star, nodes_p):
    beta_p, beta_p_star, p, p_star = (params["beta_p"], params["beta_p_star"],
                                      params["p"], params["p_star"])
    e0, e1 = edges[0], edges[1]

    # --- link term (gathers in JAX, hot path in Pallas) ---
    beta_pair = beta_p_star[e0] + beta_p[e1]
    x = p[e0]
    y = p_star[e1]
    link_term = link_log_intensity_sum(beta_pair, x, y)

    # --- non-link term ---
    beta_s = beta_p_star[nodes_p_star]   # (Ns,)
    beta_q = beta_p[nodes_p]             # (Np,)
    ps_sel = p_star[nodes_p_star]        # (Ns, D)
    p_sel = p[nodes_p]                   # (Np, D)
    non_link = nonlink_intensity_sum(beta_s, beta_q, ps_sel, p_sel)

    return -(link_term - non_link)


# ---------------------------------------------------------------------------
# Pure-JAX reference (mirrors the PyTorch ops) for the correctness check.
# ---------------------------------------------------------------------------
def ldm_forward_ref(params, edges, nodes_p_star, nodes_p):
    beta_p, beta_p_star, p, p_star = (params["beta_p"], params["beta_p_star"],
                                      params["p"], params["p_star"])
    e0, e1 = edges[0], edges[1]
    beta_pair = beta_p_star[e0] + beta_p[e1]
    diff = p[e0] - p_star[e1] + EPS
    z_dist = jnp.sqrt(jnp.sum(diff * diff, axis=-1))
    link = jnp.sum(beta_pair - z_dist)

    bs = beta_p_star[nodes_p_star]
    bq = beta_p[nodes_p]
    ps = p_star[nodes_p_star]
    pq = p[nodes_p]
    d = jnp.sqrt(jnp.maximum(
        jnp.sum(ps * ps, -1)[:, None] + jnp.sum(pq * pq, -1)[None, :]
        - 2.0 * ps @ pq.T, 0.0))
    mat = jnp.exp(bs[:, None] + bq[None, :] - d)
    rows = jnp.arange(mat.shape[0])[:, None]
    cols = jnp.arange(mat.shape[1])[None, :]
    non_link = jnp.sum(jnp.where(cols > rows, mat, 0.0))
    return -(link - non_link)


if __name__ == "__main__":
    key = jax.random.PRNGKey(0)
    N = 32    # nodes_num
    D = 8     # embedding dim
    E = 16    # number of (batch) edges
    Ns = 16   # |nodes_p_star|
    Np = 12   # |nodes_p|

    k1, k2, k3, k4, k5, k6, k7 = jax.random.split(key, 7)
    # Parameters: uniform in [-1, 1), matching 2*rand - 1 in __init__.
    params = {
        "beta_p":      jax.random.uniform(k1, (N,),  jnp.float32, -1.0, 1.0),
        "beta_p_star": jax.random.uniform(k2, (N,),  jnp.float32, -1.0, 1.0),
        "p":           jax.random.uniform(k3, (N, D), jnp.float32, -1.0, 1.0),
        "p_star":      jax.random.uniform(k4, (N, D), jnp.float32, -1.0, 1.0),
    }

    edges = jax.random.randint(k5, (2, E), 0, N, dtype=jnp.int32)
    nodes_p_star = jnp.sort(
        jax.random.permutation(k6, jnp.arange(N, dtype=jnp.int32))[:Ns])
    nodes_p = jnp.sort(
        jax.random.permutation(k7, jnp.arange(N, dtype=jnp.int32))[:Np])

    fwd = jax.jit(ldm_forward)
    nll = fwd(params, edges, nodes_p_star, nodes_p)
    nll = jax.block_until_ready(nll)

    ref = ldm_forward_ref(params, edges, nodes_p_star, nodes_p)
    assert jnp.allclose(nll, ref, rtol=1e-4, atol=1e-4), (nll, ref)

    print("KERNEL_OK")
</pallas_src>

<mosaic_0001>
module attributes {stable_mosaic.version = 11 : i64} {
  func.func @_link_kernel(%arg0: i32, %arg1: memref<1x128xf32, #tpu.memory_space<vmem>>, %arg2: memref<8x128xf32, #tpu.memory_space<vmem>>, %arg3: memref<8x128xf32, #tpu.memory_space<vmem>>, %arg4: memref<1x128xf32, #tpu.memory_space<vmem>>) attributes {dimension_semantics = [#tpu.dimension_semantics<parallel>], iteration_bounds = array<i64: 1>, scalar_prefetch = 0 : i64, scratch_operands = 0 : i64, tpu.core_type = #tpu.core_type<tc>, window_params = [{transform_indices = @transform_0, window_bounds = array<i64: 1, 128>}, {transform_indices = @transform_1, window_bounds = array<i64: 8, 128>}, {transform_indices = @transform_2, window_bounds = array<i64: 8, 128>}, {transform_indices = @transform_3, window_bounds = array<i64: 1, 128>}]} {
    %c0 = arith.constant 0 : index
    %c0_0 = arith.constant 0 : index
    %0 = vector.load %arg2[%c0, %c0_0] : memref<8x128xf32, #tpu.memory_space<vmem>>, vector<8x128xf32>
    %c0_1 = arith.constant 0 : index
    %c0_2 = arith.constant 0 : index
    %1 = vector.load %arg3[%c0_1, %c0_2] : memref<8x128xf32, #tpu.memory_space<vmem>>, vector<8x128xf32>
    %2 = arith.subf %0, %1 : vector<8x128xf32>
    %cst = arith.constant 9.99999997E-7 : f32
    %3 = vector.broadcast %cst : f32 to vector<8x128xf32>
    %4 = arith.addf %2, %3 : vector<8x128xf32>
    %5 = arith.mulf %4, %4 : vector<8x128xf32>
    %cst_3 = arith.constant dense<0.000000e+00> : vector<128xf32>
    %6 = vector.multi_reduction <add>, %5, %cst_3 [0] : vector<8x128xf32> to vector<128xf32>
    %7 = vector.shape_cast %6 : vector<128xf32> to vector<1x128xf32>
    %8 = math.sqrt %7 : vector<1x128xf32>
    %c0_4 = arith.constant 0 : index
    %c0_5 = arith.constant 0 : index
    %9 = vector.load %arg1[%c0_4, %c0_5] : memref<1x128xf32, #tpu.memory_space<vmem>>, vector<1x128xf32>
    %10 = arith.subf %9, %8 : vector<1x128xf32>
    %11 = tpu.iota {dimensions = array<i32: 1>} : vector<1x128xi32>
    %c1_i32 = arith.constant 1 : i32
    %12 = arith.addi %arg0, %c1_i32 : i32
    %c128_i32 = arith.constant 128 : i32
    %13 = arith.muli %12, %c128_i32 : i32
    %c16_i32 = arith.constant 16 : i32
    %14 = arith.cmpi sle, %13, %c16_i32 : i32
    %15 = arith.extui %14 : i1 to i32
    %c0_i32 = arith.constant 0 : i32
    %16 = arith.cmpi ne, %15, %c0_i32 : i32
    scf.if %16 {
      %22 = vector.shape_cast %10 : vector<1x128xf32> to vector<1x1x128xf32>
      %cst_10 = arith.constant dense<0.000000e+00> : vector<1xf32>
      %23 = vector.multi_reduction <add>, %22, %cst_10 [1, 2] : vector<1x1x128xf32> to vector<1xf32>
      %24 = vector.shape_cast %23 : vector<1xf32> to vector<1x1x1xf32>
      %25 = vector.extract %24[0, 0, 0] : f32 from vector<1x1x1xf32>
      %26 = vector.broadcast %25 : f32 to vector<1x1xf32>
      %c0_i32_11 = arith.constant 0 : i32
      %27 = vector.broadcast %c0_i32_11 : i32 to vector<1x128xi32>
      %28 = arith.cmpi eq, %11, %27 : vector<1x128xi32>
      %cst_12 = arith.constant 0.000000e+00 : f32
      %29 = vector.shape_cast %26 : vector<1x1xf32> to vector<1x1xf32>
      %30 = vector.broadcast %29 : vector<1x1xf32> to vector<1x128xf32>
      %31 = vector.broadcast %cst_12 : f32 to vector<1x128xf32>
      %32 = arith.select %28, %30, %31 : vector<1x128xi1>, vector<1x128xf32>
      %c0_13 = arith.constant 0 : index
      %c0_14 = arith.constant 0 : index
      %33 = vector.load %arg4[%c0_13, %c0_14] : memref<1x128xf32, #tpu.memory_space<vmem>>, vector<1x128xf32>
      tpu.vector_store %arg4[%c0_13, %c0_14], %32 {strides = array<i32>} : memref<1x128xf32, #tpu.memory_space<vmem>>, vector<1x128xf32>,
    } else {
    }
    %c1_i32_6 = arith.constant 1 : i32
    %17 = arith.addi %arg0, %c1_i32_6 : i32
    %c128_i32_7 = arith.constant 128 : i32
    %18 = arith.muli %17, %c128_i32_7 : i32
    %c16_i32_8 = arith.constant 16 : i32
    %19 = arith.cmpi sgt, %18, %c16_i32_8 : i32
    %20 = arith.extui %19 : i1 to i32
    %c0_i32_9 = arith.constant 0 : i32
    %21 = arith.cmpi ne, %20, %c0_i32_9 : i32
    scf.if %21 {
      %c128_i32_10 = arith.constant 128 : i32
      %22 = arith.muli %arg0, %c128_i32_10 : i32
      %23 = tpu.iota {dimensions = array<i32: 1>} : vector<1x128xi32>
      %24 = vector.broadcast %22 : i32 to vector<1x128xi32>
      %25 = arith.addi %24, %23 : vector<1x128xi32>
      %c16_i32_11 = arith.constant 16 : i32
      %26 = vector.broadcast %c16_i32_11 : i32 to vector<1x128xi32>
      %27 = arith.cmpi slt, %25, %26 : vector<1x128xi32>
      %cst_12 = arith.constant 0.000000e+00 : f32
      %28 = vector.broadcast %cst_12 : f32 to vector<1x128xf32>
      %29 = arith.select %27, %10, %28 : vector<1x128xi1>, vector<1x128xf32>
      %30 = vector.shape_cast %29 : vector<1x128xf32> to vector<1x1x128xf32>
      %cst_13 = arith.constant dense<0.000000e+00> : vector<1xf32>
      %31 = vector.multi_reduction <add>, %30, %cst_13 [1, 2] : vector<1x1x128xf32> to vector<1xf32>
      %32 = vector.shape_cast %31 : vector<1xf32> to vector<1x1x1xf32>
      %33 = vector.extract %32[0, 0, 0] : f32 from vector<1x1x1xf32>
      %34 = vector.broadcast %33 : f32 to vector<1x1xf32>
      %c0_i32_14 = arith.constant 0 : i32
      %35 = vector.broadcast %c0_i32_14 : i32 to vector<1x128xi32>
      %36 = arith.cmpi eq, %11, %35 : vector<1x128xi32>
      %cst_15 = arith.constant 0.000000e+00 : f32
      %37 = vector.shape_cast %34 : vector<1x1xf32> to vector<1x1xf32>
      %38 = vector.broadcast %37 : vector<1x1xf32> to vector<1x128xf32>
      %39 = vector.broadcast %cst_15 : f32 to vector<1x128xf32>
      %40 = arith.select %36, %38, %39 : vector<1x128xi1>, vector<1x128xf32>
      %c0_16 = arith.constant 0 : index
      %c0_17 = arith.constant 0 : index
      %41 = vector.load %arg4[%c0_16, %c0_17] : memref<1x128xf32, #tpu.memory_space<vmem>>, vector<1x128xf32>
      tpu.vector_store %arg4[%c0_16, %c0_17], %40 {strides = array<i32>} : memref<1x128xf32, #tpu.memory_space<vmem>>, vector<1x128xf32>,
    } else {
    }
    return
  }
  func.func @transform_0(%arg0: i32) -> (i32, i32) {
    %c0_i32 = arith.constant 0 : i32
    %c0_i32_0 = arith.constant 0 : i32
    return %c0_i32, %arg0 : i32, i32
  }
  func.func @transform_1(%arg0: i32) -> (i32, i32) {
    %c0_i32 = arith.constant 0 : i32
    %c0_i32_0 = arith.constant 0 : i32
    return %c0_i32, %arg0 : i32, i32
  }
  func.func @transform_2(%arg0: i32) -> (i32, i32) {
    %c0_i32 = arith.constant 0 : i32
    %c0_i32_0 = arith.constant 0 : i32
    return %c0_i32, %arg0 : i32, i32
  }
  func.func @transform_3(%arg0: i32) -> (i32, i32) {
    %c0_i32 = arith.constant 0 : i32
    %c0_i32_0 = arith.constant 0 : i32
    return %c0_i32, %arg0 : i32, i32
  }
}

module attributes {stable_mosaic.version = 11 : i64} {
  func.func @_nonlink_kernel(%arg0: i32, %arg1: i32, %arg2: memref<8x1xf32, #tpu.memory_space<vmem>>, %arg3: memref<1x128xf32, #tpu.memory_space<vmem>>, %arg4: memref<8x10xf32, #tpu.memory_space<vmem>>, %arg5: memref<10x128xf32, #tpu.memory_space<vmem>>, %arg6: memref<1x128xf32, #tpu.memory_space<vmem>>) attributes {dimension_semantics = [#tpu.dimension_semantics<parallel>, #tpu.dimension_semantics<arbitrary>], iteration_bounds = array<i64: 2, 1>, scalar_prefetch = 0 : i64, scratch_operands = 0 : i64, tpu.core_type = #tpu.core_type<tc>, window_params = [{transform_indices = @transform_0, window_bounds = array<i64: 8, 1>}, {transform_indices = @transform_1, window_bounds = array<i64: 1, 128>}, {transform_indices = @transform_2, window_bounds = array<i64: 8, 10>}, {transform_indices = @transform_3, window_bounds = array<i64: 10, 128>}, {transform_indices = @transform_4, window_bounds = array<i64: 1, 128>}]} {
    %c0_i32 = arith.constant 0 : i32
    %0 = arith.cmpi eq, %arg1, %c0_i32 : i32
    %1 = arith.extui %0 : i1 to i32
    %c0_i32_0 = arith.constant 0 : i32
    %2 = arith.cmpi ne, %1, %c0_i32_0 : i32
    scf.if %2 {
      %cst = arith.constant 0.000000e+00 : f32
      %10 = vector.broadcast %cst : f32 to vector<1x128xf32>
      %c0 = arith.constant 0 : index
      %c0_3 = arith.constant 0 : index
      %11 = vector.load %arg6[%c0, %c0_3] : memref<1x128xf32, #tpu.memory_space<vmem>>, vector<1x128xf32>
      tpu.vector_store %arg6[%c0, %c0_3], %10 {strides = array<i32>} : memref<1x128xf32, #tpu.memory_space<vmem>>, vector<1x128xf32>,
    } else {
    }
    %c1_i32 = arith.constant 1 : i32
    %3 = arith.addi %arg1, %c1_i32 : i32
    %c128_i32 = arith.constant 128 : i32
    %4 = arith.muli %3, %c128_i32 : i32
    %c1_i32_1 = arith.constant 1 : i32
    %5 = arith.subi %4, %c1_i32_1 : i32
    %c8_i32 = arith.constant 8 : i32
    %6 = arith.muli %arg0, %c8_i32 : i32
    %7 = arith.cmpi sgt, %5, %6 : i32
    %8 = arith.extui %7 : i1 to i32
    %c0_i32_2 = arith.constant 0 : i32
    %9 = arith.cmpi ne, %8, %c0_i32_2 : i32
    scf.if %9 {
      %c0 = arith.constant 0 : index
      %c0_3 = arith.constant 0 : index
      %10 = vector.load %arg4[%c0, %c0_3] : memref<8x10xf32, #tpu.memory_space<vmem>>, vector<8x10xf32>
      %c0_4 = arith.constant 0 : index
      %c0_5 = arith.constant 0 : index
      %11 = vector.load %arg5[%c0_4, %c0_5] : memref<10x128xf32, #tpu.memory_space<vmem>>, vector<10x128xf32>
      %cst = arith.constant dense<0.000000e+00> : vector<8x128xf32>
      %12 = tpu.matmul %10, %11, %cst {dimension_numbers = #tpu.dot_dimension_numbers<[1], [0], [0], [1], [0, 0, 1, 1], [], []>} : vector<8x10xf32>, vector<10x128xf32>, vector<8x128xf32> -> vector<8x128xf32>
      %cst_6 = arith.constant 0.000000e+00 : f32
      %13 = vector.broadcast %cst_6 : f32 to vector<8x128xf32>
      %14 = arith.maximumf %12, %13 : vector<8x128xf32>
      %15 = math.sqrt %14 : vector<8x128xf32>
      %c0_7 = arith.constant 0 : index
      %c0_8 = arith.constant 0 : index
      %16 = vector.load %arg2[%c0_7, %c0_8] : memref<8x1xf32, #tpu.memory_space<vmem>>, vector<8x1xf32>
      %c0_9 = arith.constant 0 : index
      %c0_10 = arith.constant 0 : index
      %17 = vector.load %arg3[%c0_9, %c0_10] : memref<1x128xf32, #tpu.memory_space<vmem>>, vector<1x128xf32>
      %18 = vector.broadcast %16 : vector<8x1xf32> to vector<8x128xf32>
      %19 = vector.broadcast %17 : vector<1x128xf32> to vector<8x128xf32>
      %20 = arith.addf %18, %19 : vector<8x128xf32>
      %21 = arith.subf %20, %15 : vector<8x128xf32>
      %22 = math.exp %21 : vector<8x128xf32>
      %c128_i32_11 = arith.constant 128 : i32
      %23 = arith.muli %arg1, %c128_i32_11 : i32
      %c1_i32_12 = arith.constant 1 : i32
      %24 = arith.addi %arg0, %c1_i32_12 : i32
      %c8_i32_13 = arith.constant 8 : i32
      %25 = arith.muli %24, %c8_i32_13 : i32
      %26 = arith.cmpi sge, %23, %25 : i32
      %27 = arith.extui %26 : i1 to i32
      %c0_i32_14 = arith.constant 0 : i32
      %28 = arith.cmpi ne, %27, %c0_i32_14 : i32
      scf.if %28 {
        %c0_16 = arith.constant 0 : index
        %c0_17 = arith.constant 0 : index
        %32 = vector.load %arg6[%c0_16, %c0_17] : memref<1x128xf32, #tpu.memory_space<vmem>>, vector<1x128xf32>
        %cst_18 = arith.constant dense<0.000000e+00> : vector<128xf32>
        %33 = vector.multi_reduction <add>, %22, %cst_18 [0] : vector<8x128xf32> to vector<128xf32>
        %34 = vector.shape_cast %33 : vector<128xf32> to vector<1x128xf32>
        %35 = arith.addf %32, %34 : vector<1x128xf32>
        %c0_19 = arith.constant 0 : index
        %c0_20 = arith.constant 0 : index
        %36 = vector.load %arg6[%c0_19, %c0_20] : memref<1x128xf32, #tpu.memory_space<vmem>>, vector<1x128xf32>
        tpu.vector_store %arg6[%c0_19, %c0_20], %35 {strides = array<i32>} : memref<1x128xf32, #tpu.memory_space<vmem>>, vector<1x128xf32>,
      } else {
      }
      %true = arith.constant true
      %29 = arith.xori %26, %true : i1
      %30 = arith.extui %29 : i1 to i32
      %c0_i32_15 = arith.constant 0 : i32
      %31 = arith.cmpi ne, %30, %c0_i32_15 : i32
      scf.if %31 {
        %c8_i32_16 = arith.constant 8 : i32
        %32 = arith.muli %arg0, %c8_i32_16 : i32
        %33 = tpu.iota {dimensions = array<i32: 0>} : vector<8x1xi32>
        %34 = vector.broadcast %32 : i32 to vector<8x1xi32>
        %35 = arith.addi %34, %33 : vector<8x1xi32>
        %c128_i32_17 = arith.constant 128 : i32
        %36 = arith.muli %arg1, %c128_i32_17 : i32
        %37 = tpu.iota {dimensions = array<i32: 1>} : vector<1x128xi32>
        %38 = vector.broadcast %36 : i32 to vector<1x128xi32>
        %39 = arith.addi %38, %37 : vector<1x128xi32>
        %c0_18 = arith.constant 0 : index
        %c0_19 = arith.constant 0 : index
        %40 = vector.load %arg6[%c0_18, %c0_19] : memref<1x128xf32, #tpu.memory_space<vmem>>, vector<1x128xf32>
        %41 = vector.broadcast %39 : vector<1x128xi32> to vector<8x128xi32>
        %42 = vector.broadcast %35 : vector<8x1xi32> to vector<8x128xi32>
        %43 = arith.cmpi sgt, %41, %42 : vector<8x128xi32>
        %cst_20 = arith.constant 0.000000e+00 : f32
        %44 = vector.broadcast %cst_20 : f32 to vector<8x128xf32>
        %45 = arith.select %43, %22, %44 : vector<8x128xi1>, vector<8x128xf32>
        %cst_21 = arith.constant dense<0.000000e+00> : vector<128xf32>
        %46 = vector.multi_reduction <add>, %45, %cst_21 [0] : vector<8x128xf32> to vector<128xf32>
        %47 = vector.shape_cast %46 : vector<128xf32> to vector<1x128xf32>
        %48 = arith.addf %40, %47 : vector<1x128xf32>
        %c0_22 = arith.constant 0 : index
        %c0_23 = arith.constant 0 : index
        %49 = vector.load %arg6[%c0_22, %c0_23] : memref<1x128xf32, #tpu.memory_space<vmem>>, vector<1x128xf32>
        tpu.vector_store %arg6[%c0_22, %c0_23], %48 {strides = array<i32>} : memref<1x128xf32, #tpu.memory_space<vmem>>, vector<1x128xf32>,
      } else {
      }
    } else {
    }
    return
  }
  func.func @transform_0(%arg0: i32, %arg1: i32) -> (i32, i32) {
    %c0_i32 = arith.constant 0 : i32
    %c0_i32_0 = arith.constant 0 : i32
    return %arg0, %c0_i32 : i32, i32
  }
  func.func @transform_1(%arg0: i32, %arg1: i32) -> (i32, i32) {
    %c0_i32 = arith.constant 0 : i32
    %c0_i32_0 = arith.constant 0 : i32
    return %c0_i32, %arg1 : i32, i32
  }
  func.func @transform_2(%arg0: i32, %arg1: i32) -> (i32, i32) {
    %c0_i32 = arith.constant 0 : i32
    %c0_i32_0 = arith.constant 0 : i32
    return %arg0, %c0_i32 : i32, i32
  }
  func.func @transform_3(%arg0: i32, %arg1: i32) -> (i32, i32) {
    %c0_i32 = arith.constant 0 : i32
    %c0_i32_0 = arith.constant 0 : i32
    return %c0_i32, %arg1 : i32, i32
  }
  func.func @transform_4(%arg0: i32, %arg1: i32) -> (i32, i32) {
    %c0_i32 = arith.constant 0 : i32
    %c0_i32_0 = arith.constant 0 : i32
    return %c0_i32, %arg0 : i32, i32
  }
}

</mosaic_0001>

<llo_original>
// kernel: ldm_forward.2
$region0: #{ldm_forward.2}
  #allocation0 [shape = 'u32[]', space=smem, size = 0x4, offset = 0x4, fixed_abs, tag = 'smem constant byte address 0x4 - core index']
  #allocation1 [shape = 'u32[72,128]{1,0:T(1,128)}', space=vmem, size = 0x9000, scoped, tag = 'internal scratch']
  %s0 = inlined_call_operand.vmem [shape: f32[1,128], index: 0, kind: input, shape index: {}]
  %s1 = inlined_call_operand.vmem [shape: f32[8,128], index: 1, kind: input, shape index: {}]
  %s2 = inlined_call_operand.vmem [shape: f32[8,128], index: 2, kind: input, shape index: {}]
  %s3 = inlined_call_operand.vmem [shape: f32[1,128], index: 3, kind: output, shape index: {}]
  %s4 = sld [smem:[#allocation0]]
  $region30: #{ldm_forward.2} parent=0
    _
  %s6 = ssub.s32 1, %s4
  %s7 = scalar_select 0, %s6, %s4
  // Predicated region
  $region2: #{ldm_forward.2} parent=0 // pred_check
    _
  $region3: #{ldm_forward.2} parent=0 // pred_check_branch
    %9 = sbr.rel (0) target = $region5
  $region4: #{ldm_forward.2} parent=0 // pred_region
    _
  $region5: #{ldm_forward.2} parent=0 // pred_fallthru
    _
  // Predicated region
  $region6: #{ldm_forward.2} parent=0 // pred_check
    _
  $region7: #{ldm_forward.2} parent=0 // pred_check_branch
    %11 = sbr.rel (0) target = $region9
  $region8: #{ldm_forward.2} parent=0 // pred_region
    _
  $region9: #{ldm_forward.2} parent=0 // pred_fallthru
    _
  // Predicated region
  $region10: #{ldm_forward.2} parent=0 // pred_check
    _
  $region11: #{ldm_forward.2} parent=0 // pred_check_branch
    %13 = sbr.rel (0) target = $region13
  $region12: #{ldm_forward.2} parent=0 // pred_region
    _
  $region13: #{ldm_forward.2} parent=0 // pred_fallthru
    _
  %v14 = vld [vmem:[%s1] sm:$0xff]
  %v15 = vld [vmem:[%s2] sm:$0xff]
  %v16 = vsub.f32 %v14, %v15
  %v17 = vadd.f32 %v16, 1e-06
  %v18 = vmul.f32 %v17, %v17
  %v19 = vrot.slane %v18, 4
  %v20 = vadd.f32 %v18, %v19
  %v21 = vrot.slane %v20, 2
  %v22 = vadd.f32 %v20, %v21
  %v23 = vrot.slane %v22, 1
  %v24 = vadd.f32 %v22, %v23
  %v25 = vrsqrt.pop %v24
  %v26 = vmul.f32 %v25, %v24
  %v27 = vmul.f32 %v26, %v25
  %v28 = vmul.f32 0.5, %v27
  %v29 = vsub.f32 1.5, %v28
  %v30 = vmul.f32 %v25, %v29
  %v31 = vmul.f32 %v24, %v30
  %vm32 = vcmp.eq.f32.partialorder %v24, inf
  %v33 = vsel %vm32, %v24, %v31
  %vm34 = vcmp.eq.f32.partialorder %v24, 0.0
  %v35 = vand.u32 %v24, 2147483648
  %v36 = vsel %vm34, %v35, %v33
  %v37 = vld [vmem:[%s0] sm:$0x1]
  %v38 = vsub.f32 %v37, %v36
  %v39 = vlaneseq
  %v40 = vand.u32 %v39, 127
  %s41 = sadd.s32 0, 1
  %s42 = smul.u32 %s41, 128
  %p43 = scmp.le.s32.totalorder %s42, 16
  // Predicated region
  $region14: #{ldm_forward.2} parent=0 // pred_check
    %p44 = pneg %p43
  $region15: #{ldm_forward.2} parent=0 // pred_check_branch
    %46 = sbr.rel (%p44) target = $region17
  $region16: #{ldm_forward.2} parent=0 // pred_region
    %vm47 = vcmask 1040384
    %v48 = vsel %vm47, %v38, 0.0
    %49 = vadd.xlane.f32.xlu0 %v48
    %v50 = vpop.xlane.xlu0 %49
    %v51 = vrot.slane %v50, 4
    %v52 = vadd.f32 %v50, %v51
    %v53 = vrot.slane %v52, 2
    %v54 = vadd.f32 %v52, %v53
    %v55 = vrot.slane %v54, 1
    %v56 = vadd.f32 %v54, %v55
    %s57 = vtos %v56
    %vm58 = vcmp.eq.s32.totalorder %v40, 0
    %v59 = vstv %s57
    %v60 = vsel %vm58, %v59, 0.0
    %61 = vst [vmem:[%s3] sm:$0x1] %v60
  $region17: #{ldm_forward.2} parent=0 // pred_fallthru
    _
  %p62 = scmp.gt.s32.totalorder %s42, 16
  // Predicated region
  $region18: #{ldm_forward.2} parent=0 // pred_check
    %p63 = pneg %p62
  $region19: #{ldm_forward.2} parent=0 // pred_check_branch
    %65 = sbr.rel (%p63) target = $region21
  $region20: #{ldm_forward.2} parent=0 // pred_region
    %s66 = smul.u32 0, 128
    %v67 = vstv %s66
    %v68 = vadd.s32 %v67, %v40
    %vm69 = vcmp.lt.s32.totalorder %v68, 16
    %v70 = vsel %vm69, %v38, 0.0
    %vm71 = vcmask 1040384
    %v72 = vsel %vm71, %v70, 0.0
    %73 = vadd.xlane.f32.xlu0 %v72
    %v74 = vpop.xlane.xlu0 %73
    %v75 = vrot.slane %v74, 4
    %v76 = vadd.f32 %v74, %v75
    %v77 = vrot.slane %v76, 2
    %v78 = vadd.f32 %v76, %v77
    %v79 = vrot.slane %v78, 1
    %v80 = vadd.f32 %v78, %v79
    %s81 = vtos %v80
    %vm82 = vcmp.eq.s32.totalorder %v40, 0
    %v83 = vstv %s81
    %v84 = vsel %vm82, %v83, 0.0
    %85 = vst [vmem:[%s3] sm:$0x1] %v84
  $region21: #{ldm_forward.2} parent=0 // pred_fallthru
    _
  // Predicated region
  $region22: #{ldm_forward.2} parent=0 // pred_check
    _
  $region23: #{ldm_forward.2} parent=0 // pred_check_branch
    %87 = sbr.rel (0) target = $region25
  $region24: #{ldm_forward.2} parent=0 // pred_region
    _
  $region25: #{ldm_forward.2} parent=0 // pred_fallthru
    _
  // Predicated region
  $region26: #{ldm_forward.2} parent=0 // pred_check
    _
  $region27: #{ldm_forward.2} parent=0 // pred_check_branch
    %89 = sbr.rel (0) target = $region29
  $region28: #{ldm_forward.2} parent=0 // pred_region
    _
  $region29: #{ldm_forward.2} parent=0 // pred_fallthru
    _

// kernel: ldm_forward.3
$region0: #{ldm_forward.3}
  #allocation0 [shape = 'u32[]', space=smem, size = 0x4, offset = 0x4, fixed_abs, tag = 'smem constant byte address 0x4 - core index']
  #allocation1 [shape = 'u32[72,128]{1,0:T(1,128)}', space=vmem, size = 0x9000, scoped, tag = 'internal scratch']
  %s0 = inlined_call_operand.vmem [shape: f32[16,1], index: 0, kind: input, shape index: {}]
  %s1 = inlined_call_operand.vmem [shape: f32[1,128], index: 1, kind: input, shape index: {}]
  %s2 = inlined_call_operand.vmem [shape: f32[16,10], index: 2, kind: input, shape index: {}]
  %s3 = inlined_call_operand.vmem [shape: f32[10,128], index: 3, kind: input, shape index: {}]
  %s4 = inlined_call_operand.vmem [shape: f32[1,256], index: 4, kind: output, shape index: {}]
  %s5 = sld [smem:[#allocation0]]
  $region65: #{ldm_forward.3} parent=0
    _
  %s7 = ssub.s32 1, %s5
  %s8 = scalar_select 0, %s7, %s5
  loop: start=0, step=1, limit=4
  $region2: #{ldm_forward.3} parent=0 // loop_pre_header
    _
  $region3: #{ldm_forward.3} parent=0 // loop_header
    %s10 = sphi 0, %s14
    %p11 = scmp.ge.s32.totalorder %s10, 4
    %s17 = sphi 0, %s29
    %s18 = sphi 0, %s25
    %s19 = sphi 0, %s17
    %s20 = sphi 0, %s18
    %s21 = sphi 0, %s19
    %s22 = sphi 0, %s20
    %s32 = sphi 0, %s34
    %s35 = sphi 0, %s32
    %s36 = sphi 0, %s35
    %s52 = sphi 0, %s36
    %s58 = sphi 0, %s60
    %s61 = sphi 0, %s58
    %s62 = sphi 0, %s61
    %s78 = sphi 0, %s62
    %s84 = sphi 0, %s86
    %s87 = sphi 0, %s84
    %s88 = sphi 0, %s87
    %s104 = sphi 0, %s88
    %s110 = sphi 0, %s112
    %s113 = sphi 0, %s110
    %s114 = sphi 0, %s113
    %s130 = sphi 0, %s114
    %s136 = sphi 0, %s138
    %s139 = sphi 0, %s136
    %s140 = sphi 0, %s139
    %s156 = sphi 0, %s140
  $region4: #{ldm_forward.3} parent=0 // loop_header_branch
    %13 = sbr.rel (%p11) target = $region8
  $region5: #{ldm_forward.3} parent=0 // loop_body
    %s15 = ssub.s32 %s10, 1
    %s16 = ssub.s32 %s10, 2
    %s23 = sadd.s32 1, %s18
    %p24 = scmp.ge.s32.totalorder %s23, 1
    %s25 = scalar_select %p24, 0, %s23
    %s26 = sadd.s32 1, %s17
    %s27 = scalar_select %p24, %s26, %s17
    %p28 = scmp.ge.s32.totalorder %s27, 2
    %s29 = scalar_select %p28, 0, %s27
    %s30 = ssub.s32 %s17, %s29
    %p31 = scmp.eq.s32.totalorder %s30, 0
    %s33 = sadd.s32 %s32, 1
    %s34 = scalar_select %p31, %s32, %s33
    %p37 = pneg %p31
    %p38 = scmp.eq.s32.totalorder %s10, 1
    %p39 = por %p37, %p38
    %p40 = scmp.ne.s32.totalorder %s32, %s35
    %p41 = scmp.eq.s32.totalorder %s10, 0
    %p42 = por %p40, %p41
    %p43 = scmp.ne.s32.totalorder %s32, %s35
    %p44 = scmp.eq.s32.totalorder %s15, 1
    %p45 = por %p43, %p44
    %p46 = scmp.ne.s32.totalorder %s35, %s36
    %p47 = scmp.eq.s32.totalorder %s15, 0
    %p48 = por %p46, %p47
    %p49 = scmp.ne.s32.totalorder %s35, %s36
    %p50 = scmp.eq.s32.totalorder %s16, 1
    %p51 = por %p49, %p50
    %p53 = scmp.ne.s32.totalorder %s36, %s52
    %p54 = scmp.eq.s32.totalorder %s16, 0
    %p55 = por %p53, %p54
    %s56 = ssub.s32 %s18, %s25
    %p57 = scmp.eq.s32.totalorder %s56, 0
    %s59 = sadd.s32 %s58, 1
    %s60 = scalar_select %p57, %s58, %s59
    %p63 = pneg %p57
    %p64 = scmp.eq.s32.totalorder %s10, 1
    %p65 = por %p63, %p64
    %p66 = scmp.ne.s32.totalorder %s58, %s61
    %p67 = scmp.eq.s32.totalorder %s10, 0
    %p68 = por %p66, %p67
    %p69 = scmp.ne.s32.totalorder %s58, %s61
    %p70 = scmp.eq.s32.totalorder %s15, 1
    %p71 = por %p69, %p70
    %p72 = scmp.ne.s32.totalorder %s61, %s62
    %p73 = scmp.eq.s32.totalorder %s15, 0
    %p74 = por %p72, %p73
    %p75 = scmp.ne.s32.totalorder %s61, %s62
    %p76 = scmp.eq.s32.totalorder %s16, 1
    %p77 = por %p75, %p76
    %p79 = scmp.ne.s32.totalorder %s62, %s78
    %p80 = scmp.eq.s32.totalorder %s16, 0
    %p81 = por %p79, %p80
    %s82 = ssub.s32 %s17, %s29
    %p83 = scmp.eq.s32.totalorder %s82, 0
    %s85 = sadd.s32 %s84, 1
    %s86 = scalar_select %p83, %s84, %s85
    %p89 = pneg %p83
    %p90 = scmp.eq.s32.totalorder %s10, 1
    %p91 = por %p89, %p90
    %p92 = scmp.ne.s32.totalorder %s84, %s87
    %p93 = scmp.eq.s32.totalorder %s10, 0
    %p94 = por %p92, %p93
    %p95 = scmp.ne.s32.totalorder %s84, %s87
    %p96 = scmp.eq.s32.totalorder %s15, 1
    %p97 = por %p95, %p96
    %p98 = scmp.ne.s32.totalorder %s87, %s88
    %p99 = scmp.eq.s32.totalorder %s15, 0
    %p100 = por %p98, %p99
    %p101 = scmp.ne.s32.totalorder %s87, %s88
    %p102 = scmp.eq.s32.totalorder %s16, 1
    %p103 = por %p101, %p102
    %p105 = scmp.ne.s32.totalorder %s88, %s104
    %p106 = scmp.eq.s32.totalorder %s16, 0
    %p107 = por %p105, %p106
    %s108 = ssub.s32 %s18, %s25
    %p109 = scmp.eq.s32.totalorder %s108, 0
    %s111 = sadd.s32 %s110, 1
    %s112 = scalar_select %p109, %s110, %s111
    %p115 = pneg %p109
    %p116 = scmp.eq.s32.totalorder %s10, 1
    %p117 = por %p115, %p116
    %p118 = scmp.ne.s32.totalorder %s110, %s113
    %p119 = scmp.eq.s32.totalorder %s10, 0
    %p120 = por %p118, %p119
    %p121 = scmp.ne.s32.totalorder %s110, %s113
    %p122 = scmp.eq.s32.totalorder %s15, 1
    %p123 = por %p121, %p122
    %p124 = scmp.ne.s32.totalorder %s113, %s114
    %p125 = scmp.eq.s32.totalorder %s15, 0
    %p126 = por %p124, %p125
    %p127 = scmp.ne.s32.totalorder %s113, %s114
    %p128 = scmp.eq.s32.totalorder %s16, 1
    %p129 = por %p127, %p128
    %p131 = scmp.ne.s32.totalorder %s114, %s130
    %p132 = scmp.eq.s32.totalorder %s16, 0
    %p133 = por %p131, %p132
    %s134 = ssub.s32 %s17, %s29
    %p135 = scmp.eq.s32.totalorder %s134, 0
    %s137 = sadd.s32 %s136, 1
    %s138 = scalar_select %p135, %s136, %s137
    %p141 = pneg %p135
    %p142 = scmp.eq.s32.totalorder %s10, 1
    %p143 = por %p141, %p142
    %p144 = scmp.ne.s32.totalorder %s136, %s139
    %p145 = scmp.eq.s32.totalorder %s10, 0
    %p146 = por %p144, %p145
    %p147 = scmp.ne.s32.totalorder %s136, %s139
    %p148 = scmp.eq.s32.totalorder %s15, 1
    %p149 = por %p147, %p148
    %p150 = scmp.ne.s32.totalorder %s139, %s140
    %p151 = scmp.eq.s32.totalorder %s15, 0
    %p152 = por %p150, %p151
    %p153 = scmp.ne.s32.totalorder %s139, %s140
    %p154 = scmp.eq.s32.totalorder %s16, 1
    %p155 = por %p153, %p154
    %p157 = scmp.ne.s32.totalorder %s140, %s156
    %p158 = scmp.eq.s32.totalorder %s16, 0
    %p159 = por %p157, %p158
    %p160 = scmp.le.s32.totalorder 1, %s10
    %p161 = scmp.lt.s32.totalorder %s10, 3
    %p162 = pnand %p160, %p161
    %p163 = pneg %p162
    // Predicated region
    $region9: #{ldm_forward.3} parent=5 // pred_check
      _
    $region10: #{ldm_forward.3} parent=5 // pred_check_branch
      %165 = sbr.rel (%p162) target = $region12
    $region11: #{ldm_forward.3} parent=5 // pred_region
      %s166 = ssub.s32 %s10, 1
      // Predicated region
      $region13: #{ldm_forward.3} parent=11 // pred_check
        %p167 = pneg %p74
      $region14: #{ldm_forward.3} parent=11 // pred_check_branch
        %169 = sbr.rel (%p167) target = $region16
      $region15: #{ldm_forward.3} parent=11 // pred_region
        %p170 = scmp.lt.s32.totalorder %s20, 0
        %s171 = scalar_select %p170, %s20, 0
        %s172 = scalar_lea.vmem %s1, %s171
      $region16: #{ldm_forward.3} parent=11 // pred_fallthru
        _
      // Predicated region
      $region17: #{ldm_forward.3} parent=11 // pred_check
        %p173 = pneg %p126
      $region18: #{ldm_forward.3} parent=11 // pred_check_branch
        %175 = sbr.rel (%p173) target = $region20
      $region19: #{ldm_forward.3} parent=11 // pred_region
        %p176 = scmp.lt.s32.totalorder %s20, 0
        %s177 = scalar_select %p176, %s20, 0
        %s178 = smul.addr %s177, 8
        %s179 = scalar_lea.vmem %s3, %s178
      $region20: #{ldm_forward.3} parent=11 // pred_fallthru
        _
    $region12: #{ldm_forward.3} parent=5 // pred_fallthru
      _
    %p180 = scmp.lt.s32.totalorder %s10, 2
    // Predicated region
    $region21: #{ldm_forward.3} parent=5 // pred_check
      %p181 = pneg %p180
    $region22: #{ldm_forward.3} parent=5 // pred_check_branch
      %183 = sbr.rel (%p181) target = $region24
    $region23: #{ldm_forward.3} parent=5 // pred_region
      // Predicated region
      $region25: #{ldm_forward.3} parent=23 // pred_check
        %p184 = pneg %p42
      $region26: #{ldm_forward.3} parent=23 // pred_check_branch
        %186 = sbr.rel (%p184) target = $region28
      $region27: #{ldm_forward.3} parent=23 // pred_region
        %p187 = scmp.lt.s32.totalorder %s17, 1
        %s188 = scalar_select %p187, %s17, 1
        %s189 = smul.addr %s188, 8
        %s190 = scalar_lea.vmem %s0, %s189
      $region28: #{ldm_forward.3} parent=23 // pred_fallthru
        _
      // Predicated region
      $region29: #{ldm_forward.3} parent=23 // pred_check
        %p191 = pneg %p94
      $region30: #{ldm_forward.3} parent=23 // pred_check_branch
        %193 = sbr.rel (%p191) target = $region32
      $region31: #{ldm_forward.3} parent=23 // pred_region
        %p194 = scmp.lt.s32.totalorder %s17, 1
        %s195 = scalar_select %p194, %s17, 1
        %s196 = smul.addr %s195, 8
        %s197 = scalar_lea.vmem %s2, %s196
      $region32: #{ldm_forward.3} parent=23 // pred_fallthru
        _
    $region24: #{ldm_forward.3} parent=5 // pred_fallthru
      _
    %p198 = scmp.le.s32.totalorder 1, %s10
    %p199 = scmp.lt.s32.totalorder %s10, 3
    %p200 = pnand %p198, %p199
    %p201 = pneg %p200
    // Predicated region
    $region33: #{ldm_forward.3} parent=5 // pred_check
      _
    $region34: #{ldm_forward.3} parent=5 // pred_check_branch
      %203 = sbr.rel (%p200) target = $region36
    $region35: #{ldm_forward.3} parent=5 // pred_region
      %s204 = ssub.s32 %s10, 1
      %p205 = scmp.lt.s32.totalorder %s19, 1
      %s206 = scalar_select %p205, %s19, 1
      %s207 = smul.addr %s206, 8
      %s208 = scalar_lea.vmem %s0, %s207
      %p209 = pneg %p48
      %p210 = pneg %p45
      %p211 = scmp.lt.s32.totalorder %s20, 0
      %s212 = scalar_select %p211, %s20, 0
      %s213 = scalar_lea.vmem %s1, %s212
      %p214 = pneg %p74
      %p215 = pneg %p71
      %p216 = scmp.lt.s32.totalorder %s19, 1
      %s217 = scalar_select %p216, %s19, 1
      %s218 = smul.addr %s217, 8
      %s219 = scalar_lea.vmem %s2, %s218
      %p220 = pneg %p100
      %p221 = pneg %p97
      %p222 = scmp.lt.s32.totalorder %s20, 0
      %s223 = scalar_select %p222, %s20, 0
      %s224 = smul.addr %s223, 8
      %s225 = scalar_lea.vmem %s3, %s224
      %p226 = pneg %p126
      %p227 = pneg %p123
      %p228 = pneg %p152
      %p229 = pneg %p149
      %p230 = scmp.lt.s32.totalorder %s19, 1
      %s231 = scalar_select %p230, %s19, 1
      %s232 = scalar_lea.vmem %s4, %s231
      %p233 = scmp.lt.s32.totalorder %s19, 1
      %s234 = scalar_select %p233, %s19, 1
      %s235 = smul.addr %s234, 8
      %s236 = scalar_lea.vmem %s0, %s235
      %p237 = scmp.lt.s32.totalorder %s20, 0
      %s238 = scalar_select %p237, %s20, 0
      %s239 = scalar_lea.vmem %s1, %s238
      %p240 = scmp.lt.s32.totalorder %s19, 1
      %s241 = scalar_select %p240, %s19, 1
      %s242 = smul.addr %s241, 8
      %s243 = scalar_lea.vmem %s2, %s242
      %p244 = scmp.lt.s32.totalorder %s20, 0
      %s245 = scalar_select %p244, %s20, 0
      %s246 = smul.addr %s245, 8
      %s247 = scalar_lea.vmem %s3, %s246
      %p248 = scmp.lt.s32.totalorder %s19, 1
      %s249 = scalar_select %p248, %s19, 1
      %s250 = scalar_lea.vmem %s4, %s249
      %p251 = scmp.eq.s32.totalorder %s20, 0
      // Predicated region
      $region37: #{ldm_forward.3} parent=35 // pred_check
        %p252 = pneg %p251
      $region38: #{ldm_forward.3} parent=35 // pred_check_branch
        %254 = sbr.rel (%p252) target = $region40
      $region39: #{ldm_forward.3} parent=35 // pred_region
        %255 = vst [vmem:[%s250] sm:$0x1] 0.0
      $region40: #{ldm_forward.3} parent=35 // pred_fallthru
        _
      %s256 = sadd.s32 %s20, 1
      %s257 = smul.u32 %s256, 128
      %s258 = ssub.s32 %s257, 1
      %s259 = smul.u32 %s19, 8
      %p260 = scmp.gt.s32.totalorder %s258, %s259
      // Predicated region
      $region41: #{ldm_forward.3} parent=35 // pred_check
        %p261 = pneg %p260
      $region42: #{ldm_forward.3} parent=35 // pred_check_branch
        %263 = sbr.rel (%p261) target = $region44
      $region43: #{ldm_forward.3} parent=35 // pred_region
        %v264 = vld [vmem:[%s243] sm:$0xff]
        %v265 = vld [vmem:[%s247] sm:$0xff]
        %v266 = vld [vmem:[%s247 + $0x8] sm:$0x3]
        %vm267 = vcmask 80896
        %v269 = vsel %vm267, %v264, 0
        %vm271 = vcmask 1041408
        %v273 = vsel %vm271, %v266, 0
        %275 = vmatpush.msra.mxu0 0.0
        %276 = vmatpush.msra.mxu0 0.0
        %277 = vmatpush.msra.mxu0 0.0
        %278 = vmatpush.msra.mxu0 0.0
        %279 = vmatpush.msra.mxu0 0.0
        %280 = vmatpush.msra.mxu0 0.0
        %281 = vmatpush.msra.mxu0 0.0
        %282 = vmatpush.msra.mxu0 0.0
        %283 = vmatpush.msra.mxu0 0.0
        %284 = vmatpush.msra.mxu0 0.0
        %285 = vmatpush.msra.mxu0 0.0
        %286 = vmatpush.msra.mxu0 0.0
        %287 = vmatpush.msra.mxu0 0.0
        %288 = vmatpush.msra.mxu0 0.0
        %289 = vmatpush.msra.mxu0 %v273
        %290 = vmatpush.msra.mxu0 %v265
        %291 = vmatmul.f32.gmra.mxu0 %v269
        %v292 = vpop.f32.mrf.mxu0
        %v293 = vadd.f32 0.0, %v292
        %294 = vdwg.mxu0
        %v295 = vmax.f32 %v293, 0.0
        %v296 = vrsqrt.pop %v295
        %v297 = vmul.f32 %v296, %v295
        %v298 = vmul.f32 %v297, %v296
        %v299 = vmul.f32 0.5, %v298
        %v300 = vsub.f32 1.5, %v299
        %v301 = vmul.f32 %v296, %v300
        %v302 = vmul.f32 %v295, %v301
        %vm303 = vcmp.eq.f32.partialorder %v295, inf
        %v304 = vsel %vm303, %v295, %v302
        %vm305 = vcmp.eq.f32.partialorder %v295, 0.0
        %v306 = vand.u32 %v295, 2147483648
        %v307 = vsel %vm305, %v306, %v304
        %v308 = vld [vmem:[%s236] sm:$0xff]
        %v309 = vld [vmem:[%s239] sm:$0x1]
        %311 = vset.pattern.permute.xlu0 0
        %312 = vperm.xlu0 %311, %v308
        %v313 = vpop.permute.xlu0 %312
        %v316 = vperm.slane %v309, 0
        %v318 = vadd.f32 %v313, %v316
        %v319 = vsub.f32 %v318, %v307
        %v320 = vmul.f32 %v319, 1.442695
        %v321 = vpow.pop %v320
        %s322 = smul.u32 %s20, 128
        %s323 = sadd.s32 %s19, 1
        %s324 = smul.u32 %s323, 8
        %p325 = scmp.ge.s32.totalorder %s322, %s324
        // Predicated region
        $region45: #{ldm_forward.3} parent=43 // pred_check
          %p326 = pneg %p325
        $region46: #{ldm_forward.3} parent=43 // pred_check_branch
          %328 = sbr.rel (%p326) target = $region48
        $region47: #{ldm_forward.3} parent=43 // pred_region
          %v329 = vld [vmem:[%s250] sm:$0x1]
          %v330 = vrot.slane %v321, 4
          %v331 = vadd.f32 %v321, %v330
          %v332 = vrot.slane %v331, 2
          %v333 = vadd.f32 %v331, %v332
          %v334 = vrot.slane %v333, 1
          %v335 = vadd.f32 %v333, %v334
          %v336 = vadd.f32 %v329, %v335
          %337 = vst [vmem:[%s250] sm:$0x1] %v336
        $region48: #{ldm_forward.3} parent=43 // pred_fallthru
          _
        %p338 = scmp.lt.s32.totalorder %s322, %s324
        // Predicated region
        $region49: #{ldm_forward.3} parent=43 // pred_check
          %p339 = pneg %p338
        $region50: #{ldm_forward.3} parent=43 // pred_check_branch
          %341 = sbr.rel (%p339) target = $region52
        $region51: #{ldm_forward.3} parent=43 // pred_region
          %v342 = vlaneseq
          %v343 = vshrl.u32 %v342, 7
          %v344 = vstv %s259
          %v345 = vadd.s32 %v344, %v343
          %v346 = vlaneseq
          %v347 = vand.u32 %v346, 127
          %v348 = vstv %s322
          %v349 = vadd.s32 %v348, %v347
          %v350 = vld [vmem:[%s250] sm:$0x1]
          %vm351 = vcmp.gt.s32.totalorder %v349, %v345
          %v352 = vsel %vm351, %v321, 0.0
          %v353 = vrot.slane %v352, 4
          %v354 = vadd.f32 %v352, %v353
          %v355 = vrot.slane %v354, 2
          %v356 = vadd.f32 %v354, %v355
          %v357 = vrot.slane %v356, 1
          %v358 = vadd.f32 %v356, %v357
          %v359 = vadd.f32 %v350, %v358
          %360 = vst [vmem:[%s250] sm:$0x1] %v359
        $region52: #{ldm_forward.3} parent=43 // pred_fallthru
          _
      $region44: #{ldm_forward.3} parent=35 // pred_fallthru
        _
      %p361 = scmp.lt.s32.totalorder %s19, 1
      %s362 = scalar_select %p361, %s19, 1
      %s363 = scalar_lea.vmem %s4, %s362
      // Predicated region
      $region53: #{ldm_forward.3} parent=35 // pred_check
        %p364 = pneg %p149
      $region54: #{ldm_forward.3} parent=35 // pred_check_branch
        %366 = sbr.rel (%p364) target = $region56
      $region55: #{ldm_forward.3} parent=35 // pred_region
        _
      $region56: #{ldm_forward.3} parent=35 // pred_fallthru
        _
    $region36: #{ldm_forward.3} parent=5 // pred_fallthru
      _
    %p367 = scmp.le.s32.totalorder 2, %s10
    // Predicated region
    $region57: #{ldm_forward.3} parent=5 // pred_check
      %p368 = pneg %p367
    $region58: #{ldm_forward.3} parent=5 // pred_check_branch
      %370 = sbr.rel (%p368) target = $region60
    $region59: #{ldm_forward.3} parent=5 // pred_region
      %s371 = ssub.s32 %s10, 2
      // Predicated region
      $region61: #{ldm_forward.3} parent=59 // pred_check
        %p372 = pneg %p155
      $region62: #{ldm_forward.3} parent=59 // pred_check_branch
        %374 = sbr.rel (%p372) target = $region64
      $region63: #{ldm_forward.3} parent=59 // pred_region
        %p375 = scmp.lt.s32.totalorder %s21, 1
        %s376 = scalar_select %p375, %s21, 1
        %s377 = scalar_lea.vmem %s4, %s376
      $region64: #{ldm_forward.3} parent=59 // pred_fallthru
        _
    $region60: #{ldm_forward.3} parent=5 // pred_fallthru
      _
  $region6: #{ldm_forward.3} parent=0 // loop_footer
    %s14 = sadd.s32 1, %s10
  $region7: #{ldm_forward.3} parent=0 // loop_footer_branch
    %9 = sbr.rel target = $region3
  $region8: #{ldm_forward.3} parent=0 // loop_exit
    _

</llo_original>
